<compile_context>
chip_gen: v7x
topology: tpu7x:2x2x1
jax: 0.10.0
libtpu: 0.0.40
codegen_flags: <defaults>
</compile_context>

<pallas_src>
import jax
import jax.numpy as jnp
from jax.experimental import pallas as pl
from jax.experimental.pallas import tpu as pltpu

_CHUNK = 512  # lanes per inner chunk: h1+h2+x+out ~ 28 vregs, well under 64


def _mlp_kernel(xT_ref, w1_ref, b1_ref, w2_ref, b2_ref, w3_ref, b3_ref, oT_ref):
    # Weights / biases are resident VMEM blocks (constant index maps).
    w1 = w1_ref[...].astype(jnp.float32)   # (32, 3)
    b1 = b1_ref[...].astype(jnp.float32)   # (32, 1)  broadcasts over lanes
    w2 = w2_ref[...].astype(jnp.float32)   # (16, 32)
    b2 = b2_ref[...].astype(jnp.float32)   # (16, 1)
    w3 = w3_ref[...].astype(jnp.float32)   # (3, 16)
    b3 = b3_ref[...].astype(jnp.float32)   # (3, 1)

    block_b = oT_ref.shape[1]
    n_chunks = block_b // _CHUNK           # static Python int

    @pl.loop(0, n_chunks)
    def _(c):
        off = pl.multiple_of(c * _CHUNK, _CHUNK)
        x = xT_ref[:, pl.ds(off, _CHUNK)].astype(jnp.float32)              # (3, C)
        # All three layers on the MXU; f32 accumulate; tanh goes to the EUP.
        h1 = jnp.tanh(jnp.dot(w1, x, preferred_element_type=jnp.float32) + b1)   # (32, C)
        h2 = jnp.tanh(jnp.dot(w2, h1, preferred_element_type=jnp.float32) + b2)  # (16, C)
        y = jnp.dot(w3, h2, preferred_element_type=jnp.float32) + b3             # (3, C)
        oT_ref[:, pl.ds(off, _CHUNK)] = y.astype(oT_ref.dtype)


def _round_up(v, m):
    return ((v + m - 1) // m) * m


def signal_classifier_forward_lane_major(xT, params, *, max_block_b=16384,
                                         out_dtype=None):
    """xT: (3, B) with batch on the lane (last) axis.  Returns (3, B) logits.

    No wrapper-side pad/transpose copies when B is a multiple of 512.
    Pass a bf16 xT (and/or out_dtype=jnp.bfloat16) to halve HBM traffic;
    in-kernel compute is always f32.
    """
    w1, b1, w2, b2, w3, b3 = params
    B = xT.shape[1]
    assert xT.shape[0] == 3
    out_dtype = xT.dtype if out_dtype is None else out_dtype

    # Block size: as large as possible (amortize per-grid-step overhead), but
    # keep >= ~4 tiles for big batches so both v7x TensorCores get work and
    # each core still has steps to pipeline DMA against compute.
    bb = min(max_block_b, max(_CHUNK, _round_up(pl.cdiv(B, 4), _CHUNK)))
    num_tiles = pl.cdiv(B, bb)
    B_pad = num_tiles * bb
    if B_pad != B:
        xT = jnp.pad(xT, ((0, 0), (0, B_pad - B)))   # only for ragged batches

    b1c = jnp.reshape(b1, (32, 1)).astype(jnp.float32)
    b2c = jnp.reshape(b2, (16, 1)).astype(jnp.float32)
    b3c = jnp.reshape(b3, (3, 1)).astype(jnp.float32)
    w1c = w1.astype(jnp.float32)
    w2c = w2.astype(jnp.float32)
    w3c = w3.astype(jnp.float32)

    io_bytes = 3 * B_pad * (jnp.dtype(xT.dtype).itemsize
                            + jnp.dtype(out_dtype).itemsize)
    w_bytes = sum(int(a.size) * 4 for a in (w1c, b1c, w2c, b2c, w3c, b3c))
    cost = pl.CostEstimate(
        flops=2 * B_pad * (3 * 32 + 32 * 16 + 16 * 3),
        transcendentals=48 * B_pad,
        bytes_accessed=io_bytes + w_bytes,
    )

    out_T = pl.pallas_call(
        _mlp_kernel,
        out_shape=jax.ShapeDtypeStruct((3, B_pad), out_dtype),
        grid=(num_tiles,),
        in_specs=[
            pl.BlockSpec((3, bb), lambda i: (0, i)),    # x tile (batch on lanes)
            pl.BlockSpec((32, 3), lambda i: (0, 0)),    # weights/biases resident
            pl.BlockSpec((32, 1), lambda i: (0, 0)),
            pl.BlockSpec((16, 32), lambda i: (0, 0)),
            pl.BlockSpec((16, 1), lambda i: (0, 0)),
            pl.BlockSpec((3, 16), lambda i: (0, 0)),
            pl.BlockSpec((3, 1), lambda i: (0, 0)),
        ],
        out_specs=pl.BlockSpec((3, bb), lambda i: (0, i)),
        compiler_params=pltpu.CompilerParams(
            dimension_semantics=("parallel",),          # shard across TCs on v7x
        ),
        cost_estimate=cost,
    )(xT, w1c, b1c, w2c, b2c, w3c, b3c)

    return out_T[:, :B]


def signal_classifier_forward(x, params, **kwargs):
    """x: (B, 3) like the PyTorch module.  Returns (B, 3) logits.

    Transposes only at the boundary; prefer the lane-major entry point when
    the producer/consumer can keep the (3, B) layout.
    """
    out_T = signal_classifier_forward_lane_major(jnp.asarray(x).T, params, **kwargs)
    return out_T.T


def init_params(key):
    # nn.Linear layout: weight (out, in), bias (out,).
    k1, k2, k3, k4, k5, k6 = jax.random.split(key, 6)
    w1 = jax.random.normal(k1, (32, 3), jnp.float32) * 0.1
    b1 = jax.random.normal(k2, (32,), jnp.float32) * 0.1
    w2 = jax.random.normal(k3, (16, 32), jnp.float32) * 0.1
    b2 = jax.random.normal(k4, (16,), jnp.float32) * 0.1
    w3 = jax.random.normal(k5, (3, 16), jnp.float32) * 0.1
    b3 = jax.random.normal(k6, (3,), jnp.float32) * 0.1
    return (w1, b1, w2, b2, w3, b3)


def reference_forward(x, params):
    w1, b1, w2, b2, w3, b3 = params
    h1 = jnp.tanh(x @ w1.T + b1)
    h2 = jnp.tanh(h1 @ w2.T + b2)
    return h2 @ w3.T + b3


if __name__ == "__main__":
    key = jax.random.PRNGKey(0)
    kx, kp = jax.random.split(key)
    params = init_params(kp)

    # Small demo batch (pads internally to one 512-lane chunk).
    B = 8
    x = jax.random.normal(kx, (B, 3), jnp.float32)
    out = jax.block_until_ready(signal_classifier_forward(x, params))
    ref = reference_forward(x, params)
    assert out.shape == (B, 3), out.shape
    assert jnp.allclose(out, ref, atol=1e-4, rtol=1e-4), "mismatch vs reference (B=8)"

    # Ragged multi-tile batch to exercise the grid + padded tail path.
    B2 = 600
    x2 = jax.random.normal(kx, (B2, 3), jnp.float32)
    out2 = jax.block_until_ready(signal_classifier_forward(x2, params))
    ref2 = reference_forward(x2, params)
    assert out2.shape == (B2, 3), out2.shape
    assert jnp.allclose(out2, ref2, atol=1e-4, rtol=1e-4), "mismatch vs reference (B=600)"

    print("KERNEL_OK")
</pallas_src>

<mosaic_0001>
module attributes {stable_mosaic.version = 11 : i64} {
  func.func @_mlp_kernel(%arg0: i32, %arg1: memref<3x512xf32, #tpu.memory_space<vmem>>, %arg2: memref<32x3xf32, #tpu.memory_space<vmem>>, %arg3: memref<32x1xf32, #tpu.memory_space<vmem>>, %arg4: memref<16x32xf32, #tpu.memory_space<vmem>>, %arg5: memref<16x1xf32, #tpu.memory_space<vmem>>, %arg6: memref<3x16xf32, #tpu.memory_space<vmem>>, %arg7: memref<3x1xf32, #tpu.memory_space<vmem>>, %arg8: memref<3x512xf32, #tpu.memory_space<vmem>>) attributes {dimension_semantics = [#tpu.dimension_semantics<parallel>], iteration_bounds = array<i64: 1>, scalar_prefetch = 0 : i64, scratch_operands = 0 : i64, tpu.core_type = #tpu.core_type<tc>, window_params = [{transform_indices = @transform_0, window_bounds = array<i64: 3, 512>}, {pipeline_mode = #tpu.pipeline_mode<synchronous>, transform_indices = @transform_1, window_bounds = array<i64: 32, 3>}, {pipeline_mode = #tpu.pipeline_mode<synchronous>, transform_indices = @transform_2, window_bounds = array<i64: 32, 1>}, {pipeline_mode = #tpu.pipeline_mode<synchronous>, transform_indices = @transform_3, window_bounds = array<i64: 16, 32>}, {pipeline_mode = #tpu.pipeline_mode<synchronous>, transform_indices = @transform_4, window_bounds = array<i64: 16, 1>}, {pipeline_mode = #tpu.pipeline_mode<synchronous>, transform_indices = @transform_5, window_bounds = array<i64: 3, 16>}, {pipeline_mode = #tpu.pipeline_mode<synchronous>, transform_indices = @transform_6, window_bounds = array<i64: 3, 1>}, {transform_indices = @transform_7, window_bounds = array<i64: 3, 512>}]} {
    %c0 = arith.constant 0 : index
    %c0_0 = arith.constant 0 : index
    %0 = vector.load %arg2[%c0, %c0_0] : memref<32x3xf32, #tpu.memory_space<vmem>>, vector<32x3xf32>
    %c0_1 = arith.constant 0 : index
    %c0_2 = arith.constant 0 : index
    %1 = vector.load %arg3[%c0_1, %c0_2] : memref<32x1xf32, #tpu.memory_space<vmem>>, vector<32x1xf32>
    %c0_3 = arith.constant 0 : index
    %c0_4 = arith.constant 0 : index
    %2 = vector.load %arg4[%c0_3, %c0_4] : memref<16x32xf32, #tpu.memory_space<vmem>>, vector<16x32xf32>
    %c0_5 = arith.constant 0 : index
    %c0_6 = arith.constant 0 : index
    %3 = vector.load %arg5[%c0_5, %c0_6] : memref<16x1xf32, #tpu.memory_space<vmem>>, vector<16x1xf32>
    %c0_7 = arith.constant 0 : index
    %c0_8 = arith.constant 0 : index
    %4 = vector.load %arg6[%c0_7, %c0_8] : memref<3x16xf32, #tpu.memory_space<vmem>>, vector<3x16xf32>
    %c0_9 = arith.constant 0 : index
    %c0_10 = arith.constant 0 : index
    %5 = vector.load %arg7[%c0_9, %c0_10] : memref<3x1xf32, #tpu.memory_space<vmem>>, vector<3x1xf32>
    %c0_i32 = arith.constant 0 : i32
    %c1_i32 = arith.constant 1 : i32
    %6 = arith.muli %c0_i32, %c1_i32 : i32
    %c0_i32_11 = arith.constant 0 : i32
    %7 = arith.addi %c0_i32_11, %6 : i32
    %c512_i32 = arith.constant 512 : i32
    %8 = arith.muli %7, %c512_i32 : i32
    %9 = tpu.assume_multiple %8, 512 : i32
    %c0_12 = arith.constant 0 : index
    %10 = arith.index_cast %9 : i32 to index
    %11 = vector.load %arg1[%c0_12, %10] : memref<3x512xf32, #tpu.memory_space<vmem>>, vector<3x512xf32>
    %cst = arith.constant dense<0.000000e+00> : vector<32x512xf32>
    %12 = tpu.matmul %0, %11, %cst {dimension_numbers = #tpu.dot_dimension_numbers<[1], [0], [0], [1], [0, 0, 1, 1], [], []>} : vector<32x3xf32>, vector<3x512xf32>, vector<32x512xf32> -> vector<32x512xf32>
    %13 = vector.broadcast %1 : vector<32x1xf32> to vector<32x512xf32>
    %14 = arith.addf %12, %13 : vector<32x512xf32>
    %15 = math.tanh %14 : vector<32x512xf32>
    %cst_13 = arith.constant dense<0.000000e+00> : vector<16x512xf32>
    %16 = tpu.matmul %2, %15, %cst_13 {dimension_numbers = #tpu.dot_dimension_numbers<[1], [0], [0], [1], [0, 0, 1, 1], [], []>} : vector<16x32xf32>, vector<32x512xf32>, vector<16x512xf32> -> vector<16x512xf32>
    %17 = vector.broadcast %3 : vector<16x1xf32> to vector<16x512xf32>
    %18 = arith.addf %16, %17 : vector<16x512xf32>
    %19 = math.tanh %18 : vector<16x512xf32>
    %cst_14 = arith.constant dense<0.000000e+00> : vector<3x512xf32>
    %20 = tpu.matmul %4, %19, %cst_14 {dimension_numbers = #tpu.dot_dimension_numbers<[1], [0], [0], [1], [0, 0, 1, 1], [], []>} : vector<3x16xf32>, vector<16x512xf32>, vector<3x512xf32> -> vector<3x512xf32>
    %21 = vector.broadcast %5 : vector<3x1xf32> to vector<3x512xf32>
    %22 = arith.addf %20, %21 : vector<3x512xf32>
    %c0_15 = arith.constant 0 : index
    %23 = arith.index_cast %9 : i32 to index
    %24 = vector.load %arg8[%c0_15, %23] : memref<3x512xf32, #tpu.memory_space<vmem>>, vector<3x512xf32>
    tpu.vector_store %arg8[%c0_15, %23], %22 {strides = array<i32>} : memref<3x512xf32, #tpu.memory_space<vmem>>, vector<3x512xf32>,
    %c1_i32_16 = arith.constant 1 : i32
    return
  }
  func.func @transform_0(%arg0: i32) -> (i32, i32) {
    %c0_i32 = arith.constant 0 : i32
    %c0_i32_0 = arith.constant 0 : i32
    return %c0_i32, %arg0 : i32, i32
  }
  func.func @transform_1(%arg0: i32) -> (i32, i32) {
    %c0_i32 = arith.constant 0 : i32
    %c0_i32_0 = arith.constant 0 : i32
    %c0_i32_1 = arith.constant 0 : i32
    return %c0_i32, %c0_i32_0 : i32, i32
  }
  func.func @transform_2(%arg0: i32) -> (i32, i32) {
    %c0_i32 = arith.constant 0 : i32
    %c0_i32_0 = arith.constant 0 : i32
    %c0_i32_1 = arith.constant 0 : i32
    return %c0_i32, %c0_i32_0 : i32, i32
  }
  func.func @transform_3(%arg0: i32) -> (i32, i32) {
    %c0_i32 = arith.constant 0 : i32
    %c0_i32_0 = arith.constant 0 : i32
    %c0_i32_1 = arith.constant 0 : i32
    return %c0_i32, %c0_i32_0 : i32, i32
  }
  func.func @transform_4(%arg0: i32) -> (i32, i32) {
    %c0_i32 = arith.constant 0 : i32
    %c0_i32_0 = arith.constant 0 : i32
    %c0_i32_1 = arith.constant 0 : i32
    return %c0_i32, %c0_i32_0 : i32, i32
  }
  func.func @transform_5(%arg0: i32) -> (i32, i32) {
    %c0_i32 = arith.constant 0 : i32
    %c0_i32_0 = arith.constant 0 : i32
    %c0_i32_1 = arith.constant 0 : i32
    return %c0_i32, %c0_i32_0 : i32, i32
  }
  func.func @transform_6(%arg0: i32) -> (i32, i32) {
    %c0_i32 = arith.constant 0 : i32
    %c0_i32_0 = arith.constant 0 : i32
    %c0_i32_1 = arith.constant 0 : i32
    return %c0_i32, %c0_i32_0 : i32, i32
  }
  func.func @transform_7(%arg0: i32) -> (i32, i32) {
    %c0_i32 = arith.constant 0 : i32
    %c0_i32_0 = arith.constant 0 : i32
    return %c0_i32, %arg0 : i32, i32
  }
}

</mosaic_0001>

<llo_original>
// kernel: tpu_custom_call.1
$region0: #{tpu_custom_call.1}
  #allocation0 [shape = 'u32[]', space=smem, size = 0x4, offset = 0x4, fixed_abs, tag = 'smem constant byte address 0x4 - core index']
  #allocation1 [shape = 'u32[144,128]{1,0:T(1,128)}', space=vmem, size = 0x12000, scoped, tag = 'internal scratch']
  %s0 = inlined_call_operand.vmem [shape: f32[3,512], index: 0, kind: input, shape index: {}]
  %s1 = inlined_call_operand.vmem [shape: f32[32,3], index: 1, kind: input, shape index: {}]
  %s2 = inlined_call_operand.vmem [shape: f32[32,1], index: 2, kind: input, shape index: {}]
  %s3 = inlined_call_operand.vmem [shape: f32[16,32], index: 3, kind: input, shape index: {}]
  %s4 = inlined_call_operand.vmem [shape: f32[16,1], index: 4, kind: input, shape index: {}]
  %s5 = inlined_call_operand.vmem [shape: f32[3,16], index: 5, kind: input, shape index: {}]
  %s6 = inlined_call_operand.vmem [shape: f32[3,1], index: 6, kind: input, shape index: {}]
  %s7 = inlined_call_operand.hbm [shape: f32[3,512], index: 7, kind: output, shape index: {}]
  %s8 = sld [smem:[#allocation0]]
  $region38: #{tpu_custom_call.1} parent=0
    _
  %s10 = ssub.s32 1, %s8
  %s11 = scalar_select 0, %s10, %s8
  $region1: #{tpu_custom_call.1} parent=0
    #allocation2 [shape = 'u8[8192]{0}', space=vmem, size = 0x2000, scoped, tag = 'output window, operand 0, single buffered']
    #allocation3 [shape = 's32[1]{0}', space=sflag, size = 0x4, scoped, tag = 'scoped memory for tpu_custom_call.1']
    %12 = vsyncpa [#allocation3], 0
    // Predicated region
    $region2: #{tpu_custom_call.1} parent=1 // pred_check
      _
    $region3: #{tpu_custom_call.1} parent=1 // pred_check_branch
      %14 = sbr.rel (0) target = $region5
    $region4: #{tpu_custom_call.1} parent=1 // pred_region
      _
    $region5: #{tpu_custom_call.1} parent=1 // pred_fallthru
      _
    // Predicated region
    $region6: #{tpu_custom_call.1} parent=1 // pred_check
      _
    $region7: #{tpu_custom_call.1} parent=1 // pred_check_branch
      %16 = sbr.rel (0) target = $region9
    $region8: #{tpu_custom_call.1} parent=1 // pred_region
      _
    $region9: #{tpu_custom_call.1} parent=1 // pred_fallthru
      _
    // Predicated region
    $region10: #{tpu_custom_call.1} parent=1 // pred_check
      _
    $region11: #{tpu_custom_call.1} parent=1 // pred_check_branch
      %18 = sbr.rel (0) target = $region13
    $region12: #{tpu_custom_call.1} parent=1 // pred_region
      _
    $region13: #{tpu_custom_call.1} parent=1 // pred_fallthru
      _
    // Predicated region
    $region14: #{tpu_custom_call.1} parent=1 // pred_check
      _
    $region15: #{tpu_custom_call.1} parent=1 // pred_check_branch
      %20 = sbr.rel (0) target = $region17
    $region16: #{tpu_custom_call.1} parent=1 // pred_region
      _
    $region17: #{tpu_custom_call.1} parent=1 // pred_fallthru
      _
    // Predicated region
    $region18: #{tpu_custom_call.1} parent=1 // pred_check
      _
    $region19: #{tpu_custom_call.1} parent=1 // pred_check_branch
      %22 = sbr.rel (0) target = $region21
    $region20: #{tpu_custom_call.1} parent=1 // pred_region
      _
    $region21: #{tpu_custom_call.1} parent=1 // pred_fallthru
      _
    // Predicated region
    $region22: #{tpu_custom_call.1} parent=1 // pred_check
      _
    $region23: #{tpu_custom_call.1} parent=1 // pred_check_branch
      %24 = sbr.rel (0) target = $region25
    $region24: #{tpu_custom_call.1} parent=1 // pred_region
      _
    $region25: #{tpu_custom_call.1} parent=1 // pred_fallthru
      _
    // Predicated region
    $region26: #{tpu_custom_call.1} parent=1 // pred_check
      _
    $region27: #{tpu_custom_call.1} parent=1 // pred_check_branch
      %26 = sbr.rel (0) target = $region29
    $region28: #{tpu_custom_call.1} parent=1 // pred_region
      _
    $region29: #{tpu_custom_call.1} parent=1 // pred_fallthru
      _
    %v27 = vld [vmem:[%s1] sm:$0xff]
    %v28 = vld [vmem:[%s1 + $0x8] sm:$0xff]
    %v29 = vld [vmem:[%s1 + $0x10] sm:$0xff]
    %v30 = vld [vmem:[%s1 + $0x18] sm:$0xff]
    %v31 = vld [vmem:[%s2] sm:$0xff]
    %v32 = vld [vmem:[%s2 + $0x8] sm:$0xff]
    %v33 = vld [vmem:[%s2 + $0x10] sm:$0xff]
    %v34 = vld [vmem:[%s2 + $0x18] sm:$0xff]
    %v35 = vld [vmem:[%s3] sm:$0xff]
    %v36 = vld [vmem:[%s3 + $0x8] sm:$0xff]
    %v37 = vld [vmem:[%s4] sm:$0xff]
    %v38 = vld [vmem:[%s4 + $0x8] sm:$0xff]
    %v39 = vld [vmem:[%s5] sm:$0x7]
    %v40 = vld [vmem:[%s6] sm:$0x7]
    %v41 = vld [vmem:[%s0] sm:$0x77]
    %v42 = vld [vmem:[%s0 + $0x8] sm:$0x77]
    %44 = vset.pattern.permute.xlu0 0
    %45 = vperm.xlu0 %44, %v31
    %v46 = vpop.permute.xlu0 %45
    %49 = vset.pattern.permute.xlu0 0
    %50 = vperm.xlu0 %49, %v32
    %v51 = vpop.permute.xlu0 %50
    %54 = vset.pattern.permute.xlu0 0
    %55 = vperm.xlu0 %54, %v33
    %v56 = vpop.permute.xlu0 %55
    %59 = vset.pattern.permute.xlu0 0
    %60 = vperm.xlu0 %59, %v34
    %v61 = vpop.permute.xlu0 %60
    %v65 = vcombine.high %v41, %v41
    %v66 = vcombine.high %v42, %v42
    %vm67 = vcmask 23552
    %v69 = vsel %vm67, %v27, 0
    %v72 = vsel %vm67, %v28, 0
    %v75 = vsel %vm67, %v29, 0
    %v78 = vsel %vm67, %v30, 0
    %vm80 = vcmask 1042432
    %v81 = vsel %vm80, %v41, 0
    %v83 = vsel %vm80, %v65, 0
    %v85 = vsel %vm80, %v42, 0
    %v87 = vsel %vm80, %v66, 0
    %89 = vmatprep.subr.mxu0 %v83
    %90 = vmatpush1.msra.mxu0 %v81
    %91 = vmatprep.subr.mxu0 0.0
    %92 = vmatpush1.msra.mxu0 0.0
    %93 = vmatprep.subr.mxu0 0.0
    %94 = vmatpush1.msra.mxu0 0.0
    %95 = vmatprep.subr.mxu0 0.0
    %96 = vmatpush1.msra.mxu0 0.0
    %97 = vmatprep.subr.mxu0 0.0
    %98 = vmatpush1.msra.mxu0 0.0
    %99 = vmatprep.subr.mxu0 0.0
    %100 = vmatpush1.msra.mxu0 0.0
    %101 = vmatprep.subr.mxu0 0.0
    %102 = vmatpush1.msra.mxu0 0.0
    %103 = vmatprep.subr.mxu0 0.0
    %104 = vmatpush1.msra.mxu0 0.0
    %105 = vmatprep.subr.mxu0 0.0
    %106 = vmatpush1.msra.mxu0 0.0
    %107 = vmatprep.subr.mxu0 0.0
    %108 = vmatpush1.msra.mxu0 0.0
    %109 = vmatprep.subr.mxu0 0.0
    %110 = vmatpush1.msra.mxu0 0.0
    %111 = vmatprep.subr.mxu0 0.0
    %112 = vmatpush1.msra.mxu0 0.0
    %113 = vmatprep.subr.mxu0 0.0
    %114 = vmatpush1.msra.mxu0 0.0
    %115 = vmatprep.subr.mxu0 0.0
    %116 = vmatpush1.msra.mxu0 0.0
    %117 = vmatprep.subr.mxu0 0.0
    %118 = vmatpush1.msra.mxu0 0.0
    %119 = vmatprep.subr.mxu0 0.0
    %120 = vmatpush1.msra.mxu0 0.0
    %121 = vmatprep.subr.mxu0 0.0
    %122 = vmatpush1.msra.mxu0 0.0
    %123 = vmatprep.subr.mxu0 0.0
    %124 = vmatpush1.msra.mxu0 0.0
    %125 = vmatprep.subr.mxu0 0.0
    %126 = vmatpush1.msra.mxu0 0.0
    %127 = vmatprep.subr.mxu0 0.0
    %128 = vmatpush1.msra.mxu0 0.0
    %129 = vmatprep.subr.mxu0 0.0
    %130 = vmatpush1.msra.mxu0 0.0
    %131 = vmatprep.subr.mxu0 0.0
    %132 = vmatpush1.msra.mxu0 0.0
    %133 = vmatprep.subr.mxu0 0.0
    %134 = vmatpush1.msra.mxu0 0.0
    %135 = vmatprep.subr.mxu0 0.0
    %136 = vmatpush1.msra.mxu0 0.0
    %137 = vmatprep.subr.mxu0 0.0
    %138 = vmatpush1.msra.mxu0 0.0
    %139 = vmatprep.subr.mxu0 0.0
    %140 = vmatpush1.msra.mxu0 0.0
    %141 = vmatprep.subr.mxu0 0.0
    %142 = vmatpush1.msra.mxu0 0.0
    %143 = vmatprep.subr.mxu0 0.0
    %144 = vmatpush1.msra.mxu0 0.0
    %145 = vmatprep.subr.mxu0 0.0
    %146 = vmatpush1.msra.mxu0 0.0
    %147 = vmatprep.subr.mxu0 0.0
    %148 = vmatpush1.msra.mxu0 0.0
    %149 = vmatprep.subr.mxu0 0.0
    %150 = vmatpush1.msra.mxu0 0.0
    %151 = vmatprep.subr.mxu0 0.0
    %152 = vmatpush1.msra.mxu0 0.0
    %153 = vmatprep.mubr.f32.mxu0 0.0
    %154 = vmatmul.mubr.f32.gmra.mrb[0].mxu0 %v69
    %v155 = vpop.f32.mrb[0].mxu0
    %v156 = vadd.f32 %v46, %v155
    %v157 = vpop.f32.mrb[0].mxu0
    %v158 = vadd.f32 %v46, %v157
    %159 = vmatprep.mubr.f32.mxu0 0.0
    %160 = vmatmul.mubr.f32.gmra.mrb[0].mxu0 %v72
    %v161 = vpop.f32.mrb[0].mxu0
    %v162 = vadd.f32 %v51, %v161
    %v163 = vpop.f32.mrb[0].mxu0
    %v164 = vadd.f32 %v51, %v163
    %165 = vmatprep.mubr.f32.mxu0 0.0
    %166 = vmatmul.mubr.f32.gmra.mrb[0].mxu0 %v75
    %v167 = vpop.f32.mrb[0].mxu0
    %v168 = vadd.f32 %v56, %v167
    %v169 = vpop.f32.mrb[0].mxu0
    %v170 = vadd.f32 %v56, %v169
    %171 = vmatprep.mubr.f32.mxu0 0.0
    %172 = vmatmul.mubr.f32.gmra.mrb[0].mxu0 %v78
    %v173 = vpop.f32.mrb[0].mxu0
    %v174 = vadd.f32 %v61, %v173
    %v175 = vpop.f32.mrb[0].mxu0
    %v176 = vadd.f32 %v61, %v175
    %177 = vdwg.mxu0
    %178 = vmatprep.subr.mxu0 %v87
    %179 = vmatpush1.msra.mxu0 %v85
    %180 = vmatprep.subr.mxu0 0.0
    %181 = vmatpush1.msra.mxu0 0.0
    %182 = vmatprep.subr.mxu0 0.0
    %183 = vmatpush1.msra.mxu0 0.0
    %184 = vmatprep.subr.mxu0 0.0
    %185 = vmatpush1.msra.mxu0 0.0
    %186 = vmatprep.subr.mxu0 0.0
    %187 = vmatpush1.msra.mxu0 0.0
    %188 = vmatprep.subr.mxu0 0.0
    %189 = vmatpush1.msra.mxu0 0.0
    %190 = vmatprep.subr.mxu0 0.0
    %191 = vmatpush1.msra.mxu0 0.0
    %192 = vmatprep.subr.mxu0 0.0
    %193 = vmatpush1.msra.mxu0 0.0
    %194 = vmatprep.subr.mxu0 0.0
    %195 = vmatpush1.msra.mxu0 0.0
    %196 = vmatprep.subr.mxu0 0.0
    %197 = vmatpush1.msra.mxu0 0.0
    %198 = vmatprep.subr.mxu0 0.0
    %199 = vmatpush1.msra.mxu0 0.0
    %200 = vmatprep.subr.mxu0 0.0
    %201 = vmatpush1.msra.mxu0 0.0
    %202 = vmatprep.subr.mxu0 0.0
    %203 = vmatpush1.msra.mxu0 0.0
    %204 = vmatprep.subr.mxu0 0.0
    %205 = vmatpush1.msra.mxu0 0.0
    %206 = vmatprep.subr.mxu0 0.0
    %207 = vmatpush1.msra.mxu0 0.0
    %208 = vmatprep.subr.mxu0 0.0
    %209 = vmatpush1.msra.mxu0 0.0
    %210 = vmatprep.subr.mxu0 0.0
    %211 = vmatpush1.msra.mxu0 0.0
    %212 = vmatprep.subr.mxu0 0.0
    %213 = vmatpush1.msra.mxu0 0.0
    %214 = vmatprep.subr.mxu0 0.0
    %215 = vmatpush1.msra.mxu0 0.0
    %216 = vmatprep.subr.mxu0 0.0
    %217 = vmatpush1.msra.mxu0 0.0
    %218 = vmatprep.subr.mxu0 0.0
    %219 = vmatpush1.msra.mxu0 0.0
    %220 = vmatprep.subr.mxu0 0.0
    %221 = vmatpush1.msra.mxu0 0.0
    %222 = vmatprep.subr.mxu0 0.0
    %223 = vmatpush1.msra.mxu0 0.0
    %224 = vmatprep.subr.mxu0 0.0
    %225 = vmatpush1.msra.mxu0 0.0
    %226 = vmatprep.subr.mxu0 0.0
    %227 = vmatpush1.msra.mxu0 0.0
    %228 = vmatprep.subr.mxu0 0.0
    %229 = vmatpush1.msra.mxu0 0.0
    %230 = vmatprep.subr.mxu0 0.0
    %231 = vmatpush1.msra.mxu0 0.0
    %232 = vmatprep.subr.mxu0 0.0
    %233 = vmatpush1.msra.mxu0 0.0
    %234 = vmatprep.subr.mxu0 0.0
    %235 = vmatpush1.msra.mxu0 0.0
    %236 = vmatprep.subr.mxu0 0.0
    %237 = vmatpush1.msra.mxu0 0.0
    %238 = vmatprep.subr.mxu0 0.0
    %239 = vmatpush1.msra.mxu0 0.0
    %240 = vmatprep.subr.mxu0 0.0
    %241 = vmatpush1.msra.mxu0 0.0
    %242 = vmatprep.mubr.f32.mxu0 0.0
    %243 = vmatmul.mubr.f32.gmra.mrb[0].mxu0 %v69
    %v244 = vpop.f32.mrb[0].mxu0
    %v245 = vadd.f32 %v46, %v244
    %v246 = vpop.f32.mrb[0].mxu0
    %v247 = vadd.f32 %v46, %v246
    %248 = vmatprep.mubr.f32.mxu0 0.0
    %249 = vmatmul.mubr.f32.gmra.mrb[0].mxu0 %v72
    %v250 = vpop.f32.mrb[0].mxu0
    %v251 = vadd.f32 %v51, %v250
    %v252 = vpop.f32.mrb[0].mxu0
    %v253 = vadd.f32 %v51, %v252
    %254 = vmatprep.mubr.f32.mxu0 0.0
    %255 = vmatmul.mubr.f32.gmra.mrb[0].mxu0 %v75
    %v256 = vpop.f32.mrb[0].mxu0
    %v257 = vadd.f32 %v56, %v256
    %v258 = vpop.f32.mrb[0].mxu0
    %v259 = vadd.f32 %v56, %v258
    %260 = vmatprep.mubr.f32.mxu0 0.0
    %261 = vmatmul.mubr.f32.gmra.mrb[0].mxu0 %v78
    %v262 = vpop.f32.mrb[0].mxu0
    %v263 = vadd.f32 %v61, %v262
    %v264 = vpop.f32.mrb[0].mxu0
    %v265 = vadd.f32 %v61, %v264
    %266 = vdwg.mxu0
    %v267 = vtanh.pop %v156
    %v268 = vtanh.pop %v158
    %v269 = vtanh.pop %v245
    %v270 = vtanh.pop %v247
    %v271 = vtanh.pop %v162
    %v272 = vtanh.pop %v164
    %v273 = vtanh.pop %v251
    %v274 = vtanh.pop %v253
    %v275 = vtanh.pop %v168
    %v276 = vtanh.pop %v170
    %v277 = vtanh.pop %v257
    %v278 = vtanh.pop %v259
    %v279 = vtanh.pop %v174
    %v280 = vtanh.pop %v176
    %v281 = vtanh.pop %v263
    %v282 = vtanh.pop %v265
    %284 = vset.pattern.permute.xlu0 0
    %285 = vperm.xlu0 %284, %v37
    %v286 = vpop.permute.xlu0 %285
    %289 = vset.pattern.permute.xlu0 0
    %290 = vperm.xlu0 %289, %v38
    %v291 = vpop.permute.xlu0 %290
    %vm293 = vcmask 261120
    %v295 = vsel %vm293, %v35, 0
    %v298 = vsel %vm293, %v36, 0
    %300 = vmatprep.subr.mxu0 %v268
    %301 = vmatpush1.msra.mxu0 %v267
    %302 = vmatprep.subr.mxu0 %v272
    %303 = vmatpush1.msra.mxu0 %v271
    %304 = vmatprep.subr.mxu0 %v276
    %305 = vmatpush1.msra.mxu0 %v275
    %306 = vmatprep.subr.mxu0 %v280
    %307 = vmatpush1.msra.mxu0 %v279
    %308 = vmatprep.subr.mxu0 0.0
    %309 = vmatpush1.msra.mxu0 0.0
    %310 = vmatprep.subr.mxu0 0.0
    %311 = vmatpush1.msra.mxu0 0.0
    %312 = vmatprep.subr.mxu0 0.0
    %313 = vmatpush1.msra.mxu0 0.0
    %314 = vmatprep.subr.mxu0 0.0
    %315 = vmatpush1.msra.mxu0 0.0
    %316 = vmatprep.subr.mxu0 0.0
    %317 = vmatpush1.msra.mxu0 0.0
    %318 = vmatprep.subr.mxu0 0.0
    %319 = vmatpush1.msra.mxu0 0.0
    %320 = vmatprep.subr.mxu0 0.0
    %321 = vmatpush1.msra.mxu0 0.0
    %322 = vmatprep.subr.mxu0 0.0
    %323 = vmatpush1.msra.mxu0 0.0
    %324 = vmatprep.subr.mxu0 0.0
    %325 = vmatpush1.msra.mxu0 0.0
    %326 = vmatprep.subr.mxu0 0.0
    %327 = vmatpush1.msra.mxu0 0.0
    %328 = vmatprep.subr.mxu0 0.0
    %329 = vmatpush1.msra.mxu0 0.0
    %330 = vmatprep.subr.mxu0 0.0
    %331 = vmatpush1.msra.mxu0 0.0
    %332 = vmatprep.subr.mxu0 0.0
    %333 = vmatpush1.msra.mxu0 0.0
    %334 = vmatprep.subr.mxu0 0.0
    %335 = vmatpush1.msra.mxu0 0.0
    %336 = vmatprep.subr.mxu0 0.0
    %337 = vmatpush1.msra.mxu0 0.0
    %338 = vmatprep.subr.mxu0 0.0
    %339 = vmatpush1.msra.mxu0 0.0
    %340 = vmatprep.subr.mxu0 0.0
    %341 = vmatpush1.msra.mxu0 0.0
    %342 = vmatprep.subr.mxu0 0.0
    %343 = vmatpush1.msra.mxu0 0.0
    %344 = vmatprep.subr.mxu0 0.0
    %345 = vmatpush1.msra.mxu0 0.0
    %346 = vmatprep.subr.mxu0 0.0
    %347 = vmatpush1.msra.mxu0 0.0
    %348 = vmatprep.subr.mxu0 0.0
    %349 = vmatpush1.msra.mxu0 0.0
    %350 = vmatprep.subr.mxu0 0.0
    %351 = vmatpush1.msra.mxu0 0.0
    %352 = vmatprep.subr.mxu0 0.0
    %353 = vmatpush1.msra.mxu0 0.0
    %354 = vmatprep.subr.mxu0 0.0
    %355 = vmatpush1.msra.mxu0 0.0
    %356 = vmatprep.subr.mxu0 0.0
    %357 = vmatpush1.msra.mxu0 0.0
    %358 = vmatprep.subr.mxu0 0.0
    %359 = vmatpush1.msra.mxu0 0.0
    %360 = vmatprep.subr.mxu0 0.0
    %361 = vmatpush1.msra.mxu0 0.0
    %362 = vmatprep.subr.mxu0 0.0
    %363 = vmatpush1.msra.mxu0 0.0
    %364 = vmatprep.mubr.f32.mxu0 0.0
    %365 = vmatmul.mubr.f32.gmra.mrb[0].mxu0 %v295
    %v366 = vpop.f32.mrb[0].mxu0
    %v367 = vadd.f32 %v286, %v366
    %v368 = vpop.f32.mrb[0].mxu0
    %v369 = vadd.f32 %v286, %v368
    %370 = vmatprep.mubr.f32.mxu0 0.0
    %371 = vmatmul.mubr.f32.gmra.mrb[0].mxu0 %v298
    %v372 = vpop.f32.mrb[0].mxu0
    %v373 = vadd.f32 %v291, %v372
    %v374 = vpop.f32.mrb[0].mxu0
    %v375 = vadd.f32 %v291, %v374
    %376 = vdwg.mxu0
    %377 = vmatprep.subr.mxu0 %v270
    %378 = vmatpush1.msra.mxu0 %v269
    %379 = vmatprep.subr.mxu0 %v274
    %380 = vmatpush1.msra.mxu0 %v273
    %381 = vmatprep.subr.mxu0 %v278
    %382 = vmatpush1.msra.mxu0 %v277
    %383 = vmatprep.subr.mxu0 %v282
    %384 = vmatpush1.msra.mxu0 %v281
    %385 = vmatprep.subr.mxu0 0.0
    %386 = vmatpush1.msra.mxu0 0.0
    %387 = vmatprep.subr.mxu0 0.0
    %388 = vmatpush1.msra.mxu0 0.0
    %389 = vmatprep.subr.mxu0 0.0
    %390 = vmatpush1.msra.mxu0 0.0
    %391 = vmatprep.subr.mxu0 0.0
    %392 = vmatpush1.msra.mxu0 0.0
    %393 = vmatprep.subr.mxu0 0.0
    %394 = vmatpush1.msra.mxu0 0.0
    %395 = vmatprep.subr.mxu0 0.0
    %396 = vmatpush1.msra.mxu0 0.0
    %397 = vmatprep.subr.mxu0 0.0
    %398 = vmatpush1.msra.mxu0 0.0
    %399 = vmatprep.subr.mxu0 0.0
    %400 = vmatpush1.msra.mxu0 0.0
    %401 = vmatprep.subr.mxu0 0.0
    %402 = vmatpush1.msra.mxu0 0.0
    %403 = vmatprep.subr.mxu0 0.0
    %404 = vmatpush1.msra.mxu0 0.0
    %405 = vmatprep.subr.mxu0 0.0
    %406 = vmatpush1.msra.mxu0 0.0
    %407 = vmatprep.subr.mxu0 0.0
    %408 = vmatpush1.msra.mxu0 0.0
    %409 = vmatprep.subr.mxu0 0.0
    %410 = vmatpush1.msra.mxu0 0.0
    %411 = vmatprep.subr.mxu0 0.0
    %412 = vmatpush1.msra.mxu0 0.0
    %413 = vmatprep.subr.mxu0 0.0
    %414 = vmatpush1.msra.mxu0 0.0
    %415 = vmatprep.subr.mxu0 0.0
    %416 = vmatpush1.msra.mxu0 0.0
    %417 = vmatprep.subr.mxu0 0.0
    %418 = vmatpush1.msra.mxu0 0.0
    %419 = vmatprep.subr.mxu0 0.0
    %420 = vmatpush1.msra.mxu0 0.0
    %421 = vmatprep.subr.mxu0 0.0
    %422 = vmatpush1.msra.mxu0 0.0
    %423 = vmatprep.subr.mxu0 0.0
    %424 = vmatpush1.msra.mxu0 0.0
    %425 = vmatprep.subr.mxu0 0.0
    %426 = vmatpush1.msra.mxu0 0.0
    %427 = vmatprep.subr.mxu0 0.0
    %428 = vmatpush1.msra.mxu0 0.0
    %429 = vmatprep.subr.mxu0 0.0
    %430 = vmatpush1.msra.mxu0 0.0
    %431 = vmatprep.subr.mxu0 0.0
    %432 = vmatpush1.msra.mxu0 0.0
    %433 = vmatprep.subr.mxu0 0.0
    %434 = vmatpush1.msra.mxu0 0.0
    %435 = vmatprep.subr.mxu0 0.0
    %436 = vmatpush1.msra.mxu0 0.0
    %437 = vmatprep.subr.mxu0 0.0
    %438 = vmatpush1.msra.mxu0 0.0
    %439 = vmatprep.subr.mxu0 0.0
    %440 = vmatpush1.msra.mxu0 0.0
    %441 = vmatprep.mubr.f32.mxu0 0.0
    %442 = vmatmul.mubr.f32.gmra.mrb[0].mxu0 %v295
    %v443 = vpop.f32.mrb[0].mxu0
    %v444 = vadd.f32 %v286, %v443
    %v445 = vpop.f32.mrb[0].mxu0
    %v446 = vadd.f32 %v286, %v445
    %447 = vmatprep.mubr.f32.mxu0 0.0
    %448 = vmatmul.mubr.f32.gmra.mrb[0].mxu0 %v298
    %v449 = vpop.f32.mrb[0].mxu0
    %v450 = vadd.f32 %v291, %v449
    %v451 = vpop.f32.mrb[0].mxu0
    %v452 = vadd.f32 %v291, %v451
    %453 = vdwg.mxu0
    %v454 = vtanh.pop %v367
    %v455 = vtanh.pop %v369
    %v456 = vtanh.pop %v444
    %v457 = vtanh.pop %v446
    %v458 = vtanh.pop %v373
    %v459 = vtanh.pop %v375
    %v460 = vtanh.pop %v450
    %v461 = vtanh.pop %v452
    %463 = vset.pattern.permute.xlu0 0
    %464 = vperm.xlu0 %463, %v40
    %v465 = vpop.permute.xlu0 %464
    %vm467 = vcmask 130048
    %v469 = vsel %vm467, %v39, 0
    %471 = vmatprep.subr.mxu0 %v455
    %472 = vmatpush1.msra.mxu0 %v454
    %473 = vmatprep.subr.mxu0 %v459
    %474 = vmatpush1.msra.mxu0 %v458
    %475 = vmatprep.subr.mxu0 0.0
    %476 = vmatpush1.msra.mxu0 0.0
    %477 = vmatprep.subr.mxu0 0.0
    %478 = vmatpush1.msra.mxu0 0.0
    %479 = vmatprep.subr.mxu0 0.0
    %480 = vmatpush1.msra.mxu0 0.0
    %481 = vmatprep.subr.mxu0 0.0
    %482 = vmatpush1.msra.mxu0 0.0
    %483 = vmatprep.subr.mxu0 0.0
    %484 = vmatpush1.msra.mxu0 0.0
    %485 = vmatprep.subr.mxu0 0.0
    %486 = vmatpush1.msra.mxu0 0.0
    %487 = vmatprep.subr.mxu0 0.0
    %488 = vmatpush1.msra.mxu0 0.0
    %489 = vmatprep.subr.mxu0 0.0
    %490 = vmatpush1.msra.mxu0 0.0
    %491 = vmatprep.subr.mxu0 0.0
    %492 = vmatpush1.msra.mxu0 0.0
    %493 = vmatprep.subr.mxu0 0.0
    %494 = vmatpush1.msra.mxu0 0.0
    %495 = vmatprep.subr.mxu0 0.0
    %496 = vmatpush1.msra.mxu0 0.0
    %497 = vmatprep.subr.mxu0 0.0
    %498 = vmatpush1.msra.mxu0 0.0
    %499 = vmatprep.subr.mxu0 0.0
    %500 = vmatpush1.msra.mxu0 0.0
    %501 = vmatprep.subr.mxu0 0.0
    %502 = vmatpush1.msra.mxu0 0.0
    %503 = vmatprep.subr.mxu0 0.0
    %504 = vmatpush1.msra.mxu0 0.0
    %505 = vmatprep.subr.mxu0 0.0
    %506 = vmatpush1.msra.mxu0 0.0
    %507 = vmatprep.subr.mxu0 0.0
    %508 = vmatpush1.msra.mxu0 0.0
    %509 = vmatprep.subr.mxu0 0.0
    %510 = vmatpush1.msra.mxu0 0.0
    %511 = vmatprep.subr.mxu0 0.0
    %512 = vmatpush1.msra.mxu0 0.0
    %513 = vmatprep.subr.mxu0 0.0
    %514 = vmatpush1.msra.mxu0 0.0
    %515 = vmatprep.subr.mxu0 0.0
    %516 = vmatpush1.msra.mxu0 0.0
    %517 = vmatprep.subr.mxu0 0.0
    %518 = vmatpush1.msra.mxu0 0.0
    %519 = vmatprep.subr.mxu0 0.0
    %520 = vmatpush1.msra.mxu0 0.0
    %521 = vmatprep.subr.mxu0 0.0
    %522 = vmatpush1.msra.mxu0 0.0
    %523 = vmatprep.subr.mxu0 0.0
    %524 = vmatpush1.msra.mxu0 0.0
    %525 = vmatprep.subr.mxu0 0.0
    %526 = vmatpush1.msra.mxu0 0.0
    %527 = vmatprep.subr.mxu0 0.0
    %528 = vmatpush1.msra.mxu0 0.0
    %529 = vmatprep.subr.mxu0 0.0
    %530 = vmatpush1.msra.mxu0 0.0
    %531 = vmatprep.subr.mxu0 0.0
    %532 = vmatpush1.msra.mxu0 0.0
    %533 = vmatprep.subr.mxu0 0.0
    %534 = vmatpush1.msra.mxu0 0.0
    %535 = vmatprep.mubr.f32.mxu0 0.0
    %536 = vmatmul.mubr.f32.gmra.mrb[0].mxu0 %v469
    %v537 = vpop.f32.mrb[0].mxu0
    %v538 = vadd.f32 %v465, %v537
    %v539 = vpop.f32.mrb[0].mxu0
    %v540 = vadd.f32 %v465, %v539
    %541 = vdwg.mxu0
    %542 = vmatprep.subr.mxu0 %v457
    %543 = vmatpush1.msra.mxu0 %v456
    %544 = vmatprep.subr.mxu0 %v461
    %545 = vmatpush1.msra.mxu0 %v460
    %546 = vmatprep.subr.mxu0 0.0
    %547 = vmatpush1.msra.mxu0 0.0
    %548 = vmatprep.subr.mxu0 0.0
    %549 = vmatpush1.msra.mxu0 0.0
    %550 = vmatprep.subr.mxu0 0.0
    %551 = vmatpush1.msra.mxu0 0.0
    %552 = vmatprep.subr.mxu0 0.0
    %553 = vmatpush1.msra.mxu0 0.0
    %554 = vmatprep.subr.mxu0 0.0
    %555 = vmatpush1.msra.mxu0 0.0
    %556 = vmatprep.subr.mxu0 0.0
    %557 = vmatpush1.msra.mxu0 0.0
    %558 = vmatprep.subr.mxu0 0.0
    %559 = vmatpush1.msra.mxu0 0.0
    %560 = vmatprep.subr.mxu0 0.0
    %561 = vmatpush1.msra.mxu0 0.0
    %562 = vmatprep.subr.mxu0 0.0
    %563 = vmatpush1.msra.mxu0 0.0
    %564 = vmatprep.subr.mxu0 0.0
    %565 = vmatpush1.msra.mxu0 0.0
    %566 = vmatprep.subr.mxu0 0.0
    %567 = vmatpush1.msra.mxu0 0.0
    %568 = vmatprep.subr.mxu0 0.0
    %569 = vmatpush1.msra.mxu0 0.0
    %570 = vmatprep.subr.mxu0 0.0
    %571 = vmatpush1.msra.mxu0 0.0
    %572 = vmatprep.subr.mxu0 0.0
    %573 = vmatpush1.msra.mxu0 0.0
    %574 = vmatprep.subr.mxu0 0.0
    %575 = vmatpush1.msra.mxu0 0.0
    %576 = vmatprep.subr.mxu0 0.0
    %577 = vmatpush1.msra.mxu0 0.0
    %578 = vmatprep.subr.mxu0 0.0
    %579 = vmatpush1.msra.mxu0 0.0
    %580 = vmatprep.subr.mxu0 0.0
    %581 = vmatpush1.msra.mxu0 0.0
    %582 = vmatprep.subr.mxu0 0.0
    %583 = vmatpush1.msra.mxu0 0.0
    %584 = vmatprep.subr.mxu0 0.0
    %585 = vmatpush1.msra.mxu0 0.0
    %586 = vmatprep.subr.mxu0 0.0
    %587 = vmatpush1.msra.mxu0 0.0
    %588 = vmatprep.subr.mxu0 0.0
    %589 = vmatpush1.msra.mxu0 0.0
    %590 = vmatprep.subr.mxu0 0.0
    %591 = vmatpush1.msra.mxu0 0.0
    %592 = vmatprep.subr.mxu0 0.0
    %593 = vmatpush1.msra.mxu0 0.0
    %594 = vmatprep.subr.mxu0 0.0
    %595 = vmatpush1.msra.mxu0 0.0
    %596 = vmatprep.subr.mxu0 0.0
    %597 = vmatpush1.msra.mxu0 0.0
    %598 = vmatprep.subr.mxu0 0.0
    %599 = vmatpush1.msra.mxu0 0.0
    %600 = vmatprep.subr.mxu0 0.0
    %601 = vmatpush1.msra.mxu0 0.0
    %602 = vmatprep.subr.mxu0 0.0
    %603 = vmatpush1.msra.mxu0 0.0
    %604 = vmatprep.subr.mxu0 0.0
    %605 = vmatpush1.msra.mxu0 0.0
    %606 = vmatprep.mubr.f32.mxu0 0.0
    %607 = vmatmul.mubr.f32.gmra.mrb[0].mxu0 %v469
    %v608 = vpop.f32.mrb[0].mxu0
    %v609 = vadd.f32 %v465, %v608
    %v610 = vpop.f32.mrb[0].mxu0
    %v611 = vadd.f32 %v465, %v610
    %612 = vdwg.mxu0
    %v617 = vcombine.low %v538, %v540
    %v618 = vcombine.low %v609, %v611
    %621 = vst [vmem:[#allocation2] sm:$0x77] %v617
    %622 = vst [vmem:[#allocation2 + $0x8] sm:$0x77] %v618
    // Predicated region
    $region30: #{tpu_custom_call.1} parent=1 // pred_check
      _
    $region31: #{tpu_custom_call.1} parent=1 // pred_check_branch
      %624 = sbr.rel (0) target = $region33
    $region32: #{tpu_custom_call.1} parent=1 // pred_region
      %s626 = ssub.s32 256, 256
      %627 = vsyncadd [#allocation3], %s626
      %s629 = sshll.u32 [#allocation2], 4
      %s630 = int_to_ptr.vmem [resolvable:$true] %s629
      %632 = dma.vmem_to_hbm [thread:$0]  %s630, 256, %s7, [#allocation3]
    $region33: #{tpu_custom_call.1} parent=1 // pred_fallthru
      _
    // Predicated region
    $region34: #{tpu_custom_call.1} parent=1 // pred_check
      _
    $region35: #{tpu_custom_call.1} parent=1 // pred_check_branch
      %634 = sbr.rel (0) target = $region37
    $region36: #{tpu_custom_call.1} parent=1 // pred_region
      %635 = dma.done [#allocation3], 256
    $region37: #{tpu_custom_call.1} parent=1 // pred_fallthru
      _
    %636 = vsyncpa [#allocation3], 1

</llo_original>
